<compile_context>
chip_gen: v5e
topology: v5e:2x2
jax: 0.10.0
libtpu: 0.0.40
codegen_flags: <defaults>
</compile_context>

<pallas_src>
import functools

import jax
import jax.numpy as jnp
from jax.experimental import pallas as pl
from jax.experimental.pallas import tpu as pltpu

H1 = 16
H2 = 8


def _round_up(a, b):
    return (a + b - 1) // b * b


def _mlp_kernel(x_ref, w1_ref, b1_ref, w2_ref, b2_ref, w3_ref, b3_ref, o_ref):
    # Fused hot path: three matmuls (MXU) + bias + ReLU (VPU), all in VMEM.
    x = x_ref[...]
    h = jnp.dot(x, w1_ref[...], preferred_element_type=jnp.float32) + b1_ref[...]
    h = jnp.maximum(h, 0.0)
    h = jnp.dot(h, w2_ref[...], preferred_element_type=jnp.float32) + b2_ref[...]
    h = jnp.maximum(h, 0.0)
    h = jnp.dot(h, w3_ref[...], preferred_element_type=jnp.float32) + b3_ref[...]
    o_ref[...] = jnp.maximum(h, 0.0).astype(o_ref.dtype)


@functools.partial(jax.jit, static_argnames=("block_rows",))
def node_features_ann(x, params, *, block_rows=2048):
    """x: (N, in_dims) float32. params: dict of w1,b1,w2,b2,w3,b3 (fan_in, fan_out)."""
    n, in_dims = x.shape
    out_dims = params["w3"].shape[1]

    # Lane-packing factor: fold `pack` consecutive rows into one 128-lane row.
    pack = 128 // in_dims if (in_dims <= 128 and 128 % in_dims == 0) else 1

    # Block-diagonal replicated weights / lane-tiled biases (tiny one-time cost,
    # exact in f32).  Column j*fan_out + o of layer k belongs to packed row j.
    eye = jnp.eye(pack, dtype=x.dtype)
    w1p = jnp.kron(eye, params["w1"])                                 # (pack*in,  pack*H1)
    w2p = jnp.kron(eye, params["w2"])                                 # (pack*H1,  pack*H2)
    w3p = jnp.kron(eye, params["w3"])                                 # (pack*H2,  pack*out)
    b1p = jnp.tile(params["b1"].reshape(1, H1), (1, pack))            # (1, pack*H1)
    b2p = jnp.tile(params["b2"].reshape(1, H2), (1, pack))            # (1, pack*H2)
    b3p = jnp.tile(params["b3"].reshape(1, out_dims), (1, pack))      # (1, pack*out)

    # Pad rows to a multiple of `pack`, then fold groups of `pack` rows into lanes.
    np_rows = -(-n // pack)
    n_row_pad = np_rows * pack
    x_p = jnp.pad(x, ((0, n_row_pad - n), (0, 0))) if n_row_pad != n else x
    x_packed = x_p.reshape(np_rows, pack * in_dims)

    # Pick a sublane-aligned packed-row tile; pad the packed rows to a multiple of it.
    desired = max(8, (block_rows // pack) // 8 * 8)
    block_packed = min(desired, _round_up(np_rows, 8))
    np_padded = _round_up(np_rows, block_packed)
    if np_padded != np_rows:
        x_packed = jnp.pad(x_packed, ((0, np_padded - np_rows), (0, 0)))

    grid = (np_padded // block_packed,)
    full = lambda shape: pl.BlockSpec(shape, lambda i: (0, 0))

    out_packed = pl.pallas_call(
        _mlp_kernel,
        out_shape=jax.ShapeDtypeStruct((np_padded, pack * out_dims), x.dtype),
        grid_spec=pl.GridSpec(
            grid=grid,
            in_specs=[
                pl.BlockSpec((block_packed, pack * in_dims), lambda i: (i, 0)),  # x tile
                full(w1p.shape), full(b1p.shape),                                # layer 1
                full(w2p.shape), full(b2p.shape),                                # layer 2
                full(w3p.shape), full(b3p.shape),                                # layer 3
            ],
            out_specs=pl.BlockSpec((block_packed, pack * out_dims), lambda i: (i, 0)),
        ),
        compiler_params=pltpu.CompilerParams(
            dimension_semantics=("parallel",)),
    )(x_packed, w1p, b1p, w2p, b2p, w3p, b3p)

    # TODO(synk): could pack 32 rows per 128-lane output row for fully lane-dense
    # stores; current output is already pack*out_dims lanes wide.
    out = out_packed[:np_rows].reshape(n_row_pad, out_dims)[:n]
    return out


def init_params(key, in_dims, out_dims):
    """Deterministic init mimicking nn.Linear default (U(-1/sqrt(fan_in), +))."""
    ks = jax.random.split(key, 6)

    def lin(kw, kb, fan_in, fan_out):
        bound = 1.0 / jnp.sqrt(fan_in)
        w = jax.random.uniform(kw, (fan_in, fan_out), jnp.float32, -bound, bound)
        b = jax.random.uniform(kb, (fan_out,), jnp.float32, -bound, bound)
        return w, b

    w1, b1 = lin(ks[0], ks[1], in_dims, H1)
    w2, b2 = lin(ks[2], ks[3], H1, H2)
    w3, b3 = lin(ks[4], ks[5], H2, out_dims)
    return dict(w1=w1, b1=b1, w2=w2, b2=b2, w3=w3, b3=b3)


def _reference(x, p):
    h = jnp.maximum(x @ p["w1"] + p["b1"], 0.0)
    h = jnp.maximum(h @ p["w2"] + p["b2"], 0.0)
    return jnp.maximum(h @ p["w3"] + p["b3"], 0.0)


if __name__ == "__main__":
    key = jax.random.PRNGKey(0)
    k_x, k_p, k_x2 = jax.random.split(key, 3)

    in_dims, out_dims = 32, 4
    params = init_params(k_p, in_dims, out_dims)

    # Case 1: small, pack-aligned batch.
    x = jax.random.normal(k_x, (16, in_dims), jnp.float32)
    out = jax.block_until_ready(node_features_ann(x, params))
    ref = _reference(x, params)
    assert out.shape == (16, out_dims)
    assert jnp.allclose(out, ref, atol=1e-5, rtol=1e-5), "mismatch vs reference (aligned)"

    # Case 2: ragged batch exercising the padding path.
    x2 = jax.random.normal(k_x2, (10, in_dims), jnp.float32)
    out2 = jax.block_until_ready(node_features_ann(x2, params))
    ref2 = _reference(x2, params)
    assert out2.shape == (10, out_dims)
    assert jnp.allclose(out2, ref2, atol=1e-5, rtol=1e-5), "mismatch vs reference (ragged)"

    print("KERNEL_OK")
</pallas_src>

<mosaic_0001>
module attributes {stable_mosaic.version = 11 : i64} {
  func.func @_mlp_kernel(%arg0: i32, %arg1: memref<8x128xf32, #tpu.memory_space<vmem>>, %arg2: memref<128x64xf32, #tpu.memory_space<vmem>>, %arg3: memref<1x64xf32, #tpu.memory_space<vmem>>, %arg4: memref<64x32xf32, #tpu.memory_space<vmem>>, %arg5: memref<1x32xf32, #tpu.memory_space<vmem>>, %arg6: memref<32x16xf32, #tpu.memory_space<vmem>>, %arg7: memref<1x16xf32, #tpu.memory_space<vmem>>, %arg8: memref<8x16xf32, #tpu.memory_space<vmem>>) attributes {dimension_semantics = [#tpu.dimension_semantics<parallel>], iteration_bounds = array<i64: 1>, scalar_prefetch = 0 : i64, scratch_operands = 0 : i64, tpu.core_type = #tpu.core_type<tc>, window_params = [{transform_indices = @transform_0, window_bounds = array<i64: 8, 128>}, {pipeline_mode = #tpu.pipeline_mode<synchronous>, transform_indices = @transform_1, window_bounds = array<i64: 128, 64>}, {pipeline_mode = #tpu.pipeline_mode<synchronous>, transform_indices = @transform_2, window_bounds = array<i64: 1, 64>}, {pipeline_mode = #tpu.pipeline_mode<synchronous>, transform_indices = @transform_3, window_bounds = array<i64: 64, 32>}, {pipeline_mode = #tpu.pipeline_mode<synchronous>, transform_indices = @transform_4, window_bounds = array<i64: 1, 32>}, {pipeline_mode = #tpu.pipeline_mode<synchronous>, transform_indices = @transform_5, window_bounds = array<i64: 32, 16>}, {pipeline_mode = #tpu.pipeline_mode<synchronous>, transform_indices = @transform_6, window_bounds = array<i64: 1, 16>}, {transform_indices = @transform_7, window_bounds = array<i64: 8, 16>}]} {
    %c0 = arith.constant 0 : index
    %c0_0 = arith.constant 0 : index
    %0 = vector.load %arg1[%c0, %c0_0] : memref<8x128xf32, #tpu.memory_space<vmem>>, vector<8x128xf32>
    %c0_1 = arith.constant 0 : index
    %c0_2 = arith.constant 0 : index
    %1 = vector.load %arg2[%c0_1, %c0_2] : memref<128x64xf32, #tpu.memory_space<vmem>>, vector<128x64xf32>
    %cst = arith.constant dense<0.000000e+00> : vector<8x64xf32>
    %2 = tpu.matmul %0, %1, %cst {dimension_numbers = #tpu.dot_dimension_numbers<[1], [0], [0], [1], [0, 0, 1, 1], [], []>} : vector<8x128xf32>, vector<128x64xf32>, vector<8x64xf32> -> vector<8x64xf32>
    %c0_3 = arith.constant 0 : index
    %c0_4 = arith.constant 0 : index
    %3 = vector.load %arg3[%c0_3, %c0_4] : memref<1x64xf32, #tpu.memory_space<vmem>>, vector<1x64xf32>
    %4 = vector.broadcast %3 : vector<1x64xf32> to vector<8x64xf32>
    %5 = arith.addf %2, %4 : vector<8x64xf32>
    %cst_5 = arith.constant 0.000000e+00 : f32
    %6 = vector.broadcast %cst_5 : f32 to vector<8x64xf32>
    %7 = arith.maximumf %5, %6 : vector<8x64xf32>
    %c0_6 = arith.constant 0 : index
    %c0_7 = arith.constant 0 : index
    %8 = vector.load %arg4[%c0_6, %c0_7] : memref<64x32xf32, #tpu.memory_space<vmem>>, vector<64x32xf32>
    %cst_8 = arith.constant dense<0.000000e+00> : vector<8x32xf32>
    %9 = tpu.matmul %7, %8, %cst_8 {dimension_numbers = #tpu.dot_dimension_numbers<[1], [0], [0], [1], [0, 0, 1, 1], [], []>} : vector<8x64xf32>, vector<64x32xf32>, vector<8x32xf32> -> vector<8x32xf32>
    %c0_9 = arith.constant 0 : index
    %c0_10 = arith.constant 0 : index
    %10 = vector.load %arg5[%c0_9, %c0_10] : memref<1x32xf32, #tpu.memory_space<vmem>>, vector<1x32xf32>
    %11 = vector.broadcast %10 : vector<1x32xf32> to vector<8x32xf32>
    %12 = arith.addf %9, %11 : vector<8x32xf32>
    %cst_11 = arith.constant 0.000000e+00 : f32
    %13 = vector.broadcast %cst_11 : f32 to vector<8x32xf32>
    %14 = arith.maximumf %12, %13 : vector<8x32xf32>
    %c0_12 = arith.constant 0 : index
    %c0_13 = arith.constant 0 : index
    %15 = vector.load %arg6[%c0_12, %c0_13] : memref<32x16xf32, #tpu.memory_space<vmem>>, vector<32x16xf32>
    %cst_14 = arith.constant dense<0.000000e+00> : vector<8x16xf32>
    %16 = tpu.matmul %14, %15, %cst_14 {dimension_numbers = #tpu.dot_dimension_numbers<[1], [0], [0], [1], [0, 0, 1, 1], [], []>} : vector<8x32xf32>, vector<32x16xf32>, vector<8x16xf32> -> vector<8x16xf32>
    %c0_15 = arith.constant 0 : index
    %c0_16 = arith.constant 0 : index
    %17 = vector.load %arg7[%c0_15, %c0_16] : memref<1x16xf32, #tpu.memory_space<vmem>>, vector<1x16xf32>
    %18 = vector.broadcast %17 : vector<1x16xf32> to vector<8x16xf32>
    %19 = arith.addf %16, %18 : vector<8x16xf32>
    %cst_17 = arith.constant 0.000000e+00 : f32
    %20 = vector.broadcast %cst_17 : f32 to vector<8x16xf32>
    %21 = arith.maximumf %19, %20 : vector<8x16xf32>
    %c0_18 = arith.constant 0 : index
    %c0_19 = arith.constant 0 : index
    %22 = vector.load %arg8[%c0_18, %c0_19] : memref<8x16xf32, #tpu.memory_space<vmem>>, vector<8x16xf32>
    tpu.vector_store %arg8[%c0_18, %c0_19], %21 {strides = array<i32>} : memref<8x16xf32, #tpu.memory_space<vmem>>, vector<8x16xf32>,
    return
  }
  func.func @transform_0(%arg0: i32) -> (i32, i32) {
    %c0_i32 = arith.constant 0 : i32
    %c0_i32_0 = arith.constant 0 : i32
    return %arg0, %c0_i32 : i32, i32
  }
  func.func @transform_1(%arg0: i32) -> (i32, i32) {
    %c0_i32 = arith.constant 0 : i32
    %c0_i32_0 = arith.constant 0 : i32
    %c0_i32_1 = arith.constant 0 : i32
    return %c0_i32, %c0_i32_0 : i32, i32
  }
  func.func @transform_2(%arg0: i32) -> (i32, i32) {
    %c0_i32 = arith.constant 0 : i32
    %c0_i32_0 = arith.constant 0 : i32
    %c0_i32_1 = arith.constant 0 : i32
    return %c0_i32, %c0_i32_0 : i32, i32
  }
  func.func @transform_3(%arg0: i32) -> (i32, i32) {
    %c0_i32 = arith.constant 0 : i32
    %c0_i32_0 = arith.constant 0 : i32
    %c0_i32_1 = arith.constant 0 : i32
    return %c0_i32, %c0_i32_0 : i32, i32
  }
  func.func @transform_4(%arg0: i32) -> (i32, i32) {
    %c0_i32 = arith.constant 0 : i32
    %c0_i32_0 = arith.constant 0 : i32
    %c0_i32_1 = arith.constant 0 : i32
    return %c0_i32, %c0_i32_0 : i32, i32
  }
  func.func @transform_5(%arg0: i32) -> (i32, i32) {
    %c0_i32 = arith.constant 0 : i32
    %c0_i32_0 = arith.constant 0 : i32
    %c0_i32_1 = arith.constant 0 : i32
    return %c0_i32, %c0_i32_0 : i32, i32
  }
  func.func @transform_6(%arg0: i32) -> (i32, i32) {
    %c0_i32 = arith.constant 0 : i32
    %c0_i32_0 = arith.constant 0 : i32
    %c0_i32_1 = arith.constant 0 : i32
    return %c0_i32, %c0_i32_0 : i32, i32
  }
  func.func @transform_7(%arg0: i32) -> (i32, i32) {
    %c0_i32 = arith.constant 0 : i32
    %c0_i32_0 = arith.constant 0 : i32
    return %arg0, %c0_i32 : i32, i32
  }
}

</mosaic_0001>

<llo_original>
// kernel: node_features_ann.1
$region0: #{node_features_ann.1}
  #allocation0 [shape = 'u32[]', space=smem, size = 0x4, offset = 0x4, fixed_abs, tag = 'smem constant byte address 0x4 - core index']
  #allocation1 [shape = 'u32[72,128]{1,0:T(1,128)}', space=vmem, size = 0x9000, scoped, tag = 'internal scratch']
  %s0 = inlined_call_operand.vmem [shape: f32[8,128], index: 0, kind: input, shape index: {}]
  %s1 = inlined_call_operand.vmem [shape: f32[128,64], index: 1, kind: input, shape index: {}]
  %s2 = inlined_call_operand.vmem [shape: f32[1,64], index: 2, kind: input, shape index: {}]
  %s3 = inlined_call_operand.vmem [shape: f32[64,32], index: 3, kind: input, shape index: {}]
  %s4 = inlined_call_operand.vmem [shape: f32[1,32], index: 4, kind: input, shape index: {}]
  %s5 = inlined_call_operand.vmem [shape: f32[32,16], index: 5, kind: input, shape index: {}]
  %s6 = inlined_call_operand.vmem [shape: f32[1,16], index: 6, kind: input, shape index: {}]
  %s7 = inlined_call_operand.vmem [shape: f32[8,16], index: 7, kind: output, shape index: {}]
  %s8 = sld [smem:[#allocation0]]
  $region38: #{node_features_ann.1} parent=0
    _
  %s10 = ssub.s32 1, %s8
  %s11 = scalar_select 0, %s10, %s8
  // Predicated region
  $region2: #{node_features_ann.1} parent=0 // pred_check
    _
  $region3: #{node_features_ann.1} parent=0 // pred_check_branch
    %13 = sbr.rel (0) target = $region5
  $region4: #{node_features_ann.1} parent=0 // pred_region
    _
  $region5: #{node_features_ann.1} parent=0 // pred_fallthru
    _
  // Predicated region
  $region6: #{node_features_ann.1} parent=0 // pred_check
    _
  $region7: #{node_features_ann.1} parent=0 // pred_check_branch
    %15 = sbr.rel (0) target = $region9
  $region8: #{node_features_ann.1} parent=0 // pred_region
    _
  $region9: #{node_features_ann.1} parent=0 // pred_fallthru
    _
  // Predicated region
  $region10: #{node_features_ann.1} parent=0 // pred_check
    _
  $region11: #{node_features_ann.1} parent=0 // pred_check_branch
    %17 = sbr.rel (0) target = $region13
  $region12: #{node_features_ann.1} parent=0 // pred_region
    _
  $region13: #{node_features_ann.1} parent=0 // pred_fallthru
    _
  // Predicated region
  $region14: #{node_features_ann.1} parent=0 // pred_check
    _
  $region15: #{node_features_ann.1} parent=0 // pred_check_branch
    %19 = sbr.rel (0) target = $region17
  $region16: #{node_features_ann.1} parent=0 // pred_region
    _
  $region17: #{node_features_ann.1} parent=0 // pred_fallthru
    _
  // Predicated region
  $region18: #{node_features_ann.1} parent=0 // pred_check
    _
  $region19: #{node_features_ann.1} parent=0 // pred_check_branch
    %21 = sbr.rel (0) target = $region21
  $region20: #{node_features_ann.1} parent=0 // pred_region
    _
  $region21: #{node_features_ann.1} parent=0 // pred_fallthru
    _
  // Predicated region
  $region22: #{node_features_ann.1} parent=0 // pred_check
    _
  $region23: #{node_features_ann.1} parent=0 // pred_check_branch
    %23 = sbr.rel (0) target = $region25
  $region24: #{node_features_ann.1} parent=0 // pred_region
    _
  $region25: #{node_features_ann.1} parent=0 // pred_fallthru
    _
  // Predicated region
  $region26: #{node_features_ann.1} parent=0 // pred_check
    _
  $region27: #{node_features_ann.1} parent=0 // pred_check_branch
    %25 = sbr.rel (0) target = $region29
  $region28: #{node_features_ann.1} parent=0 // pred_region
    _
  $region29: #{node_features_ann.1} parent=0 // pred_fallthru
    _
  %v26 = vld [vmem:[%s0] sm:$0xff]
  %v27 = vld [vmem:[%s1] sm:$0xff]
  %v28 = vld [vmem:[%s1 + $0x8] sm:$0xff]
  %v29 = vld [vmem:[%s1 + $0x10] sm:$0xff]
  %v30 = vld [vmem:[%s1 + $0x18] sm:$0xff]
  %v31 = vld [vmem:[%s1 + $0x20] sm:$0xff]
  %v32 = vld [vmem:[%s1 + $0x28] sm:$0xff]
  %v33 = vld [vmem:[%s1 + $0x30] sm:$0xff]
  %v34 = vld [vmem:[%s1 + $0x38] sm:$0xff]
  %v35 = vld [vmem:[%s1 + $0x40] sm:$0xff]
  %v36 = vld [vmem:[%s1 + $0x48] sm:$0xff]
  %v37 = vld [vmem:[%s1 + $0x50] sm:$0xff]
  %v38 = vld [vmem:[%s1 + $0x58] sm:$0xff]
  %v39 = vld [vmem:[%s1 + $0x60] sm:$0xff]
  %v40 = vld [vmem:[%s1 + $0x68] sm:$0xff]
  %v41 = vld [vmem:[%s1 + $0x70] sm:$0xff]
  %v42 = vld [vmem:[%s1 + $0x78] sm:$0xff]
  %v43 = vld [vmem:[%s2] sm:$0x1]
  %v45 = vperm.slane %v43, 0
  %47 = vmatpush.msra.mxu0 %v42
  %48 = vmatpush.msra.mxu0 %v41
  %49 = vmatpush.msra.mxu0 %v40
  %50 = vmatpush.msra.mxu0 %v39
  %51 = vmatpush.msra.mxu0 %v38
  %52 = vmatpush.msra.mxu0 %v37
  %53 = vmatpush.msra.mxu0 %v36
  %54 = vmatpush.msra.mxu0 %v35
  %55 = vmatpush.msra.mxu0 %v34
  %56 = vmatpush.msra.mxu0 %v33
  %57 = vmatpush.msra.mxu0 %v32
  %58 = vmatpush.msra.mxu0 %v31
  %59 = vmatpush.msra.mxu0 %v30
  %60 = vmatpush.msra.mxu0 %v29
  %61 = vmatpush.msra.mxu0 %v28
  %62 = vmatpush.msra.mxu0 %v27
  %63 = vmatmul.f32.gmra.mxu0 %v26
  %v64 = vpop.f32.mrf.mxu0
  %v65 = vadd.f32 %v45, %v64
  %66 = vdwg.mxu0
  %v67 = vmax.f32 %v65, 0.0
  %v68 = vld [vmem:[%s3] sm:$0xff]
  %v69 = vld [vmem:[%s3 + $0x8] sm:$0xff]
  %v70 = vld [vmem:[%s3 + $0x10] sm:$0xff]
  %v71 = vld [vmem:[%s3 + $0x18] sm:$0xff]
  %v72 = vld [vmem:[%s3 + $0x20] sm:$0xff]
  %v73 = vld [vmem:[%s3 + $0x28] sm:$0xff]
  %v74 = vld [vmem:[%s3 + $0x30] sm:$0xff]
  %v75 = vld [vmem:[%s3 + $0x38] sm:$0xff]
  %v76 = vld [vmem:[%s4] sm:$0x1]
  %v78 = vperm.slane %v76, 0
  %vm80 = vcmask 523264
  %v82 = vsel %vm80, %v67, 0
  %84 = vmatpush.msra.mxu0 0.0
  %85 = vmatpush.msra.mxu0 0.0
  %86 = vmatpush.msra.mxu0 0.0
  %87 = vmatpush.msra.mxu0 0.0
  %88 = vmatpush.msra.mxu0 0.0
  %89 = vmatpush.msra.mxu0 0.0
  %90 = vmatpush.msra.mxu0 0.0
  %91 = vmatpush.msra.mxu0 0.0
  %92 = vmatpush.msra.mxu0 %v75
  %93 = vmatpush.msra.mxu0 %v74
  %94 = vmatpush.msra.mxu0 %v73
  %95 = vmatpush.msra.mxu0 %v72
  %96 = vmatpush.msra.mxu0 %v71
  %97 = vmatpush.msra.mxu0 %v70
  %98 = vmatpush.msra.mxu0 %v69
  %99 = vmatpush.msra.mxu0 %v68
  %100 = vmatmul.f32.gmra.mxu0 %v82
  %v101 = vpop.f32.mrf.mxu0
  %v102 = vadd.f32 %v78, %v101
  %103 = vdwg.mxu0
  %v104 = vmax.f32 %v102, 0.0
  %v105 = vld [vmem:[%s5] sm:$0xff]
  %v106 = vld [vmem:[%s5 + $0x8] sm:$0xff]
  %v107 = vld [vmem:[%s5 + $0x10] sm:$0xff]
  %v108 = vld [vmem:[%s5 + $0x18] sm:$0xff]
  %v109 = vld [vmem:[%s6] sm:$0x1]
  %v111 = vperm.slane %v109, 0
  %vm113 = vcmask 261120
  %v115 = vsel %vm113, %v104, 0
  %117 = vmatpush.msra.mxu0 0.0
  %118 = vmatpush.msra.mxu0 0.0
  %119 = vmatpush.msra.mxu0 0.0
  %120 = vmatpush.msra.mxu0 0.0
  %121 = vmatpush.msra.mxu0 0.0
  %122 = vmatpush.msra.mxu0 0.0
  %123 = vmatpush.msra.mxu0 0.0
  %124 = vmatpush.msra.mxu0 0.0
  %125 = vmatpush.msra.mxu0 0.0
  %126 = vmatpush.msra.mxu0 0.0
  %127 = vmatpush.msra.mxu0 0.0
  %128 = vmatpush.msra.mxu0 0.0
  %129 = vmatpush.msra.mxu0 %v108
  %130 = vmatpush.msra.mxu0 %v107
  %131 = vmatpush.msra.mxu0 %v106
  %132 = vmatpush.msra.mxu0 %v105
  %133 = vmatmul.f32.gmra.mxu0 %v115
  %v134 = vpop.f32.mrf.mxu0
  %v135 = vadd.f32 %v111, %v134
  %136 = vdwg.mxu0
  %v137 = vmax.f32 %v135, 0.0
  %vm138 = vcmask 130048
  %139 = vst.msk [vmem:[%s7] sm:$0xff] %vm138, %v137
  // Predicated region
  $region30: #{node_features_ann.1} parent=0 // pred_check
    _
  $region31: #{node_features_ann.1} parent=0 // pred_check_branch
    %141 = sbr.rel (0) target = $region33
  $region32: #{node_features_ann.1} parent=0 // pred_region
    _
  $region33: #{node_features_ann.1} parent=0 // pred_fallthru
    _
  // Predicated region
  $region34: #{node_features_ann.1} parent=0 // pred_check
    _
  $region35: #{node_features_ann.1} parent=0 // pred_check_branch
    %143 = sbr.rel (0) target = $region37
  $region36: #{node_features_ann.1} parent=0 // pred_region
    _
  $region37: #{node_features_ann.1} parent=0 // pred_fallthru
    _

</llo_original>
